<compile_context>
chip_gen: v7x
topology: tpu7x:2x2x1
jax: 0.10.0
libtpu: 0.0.40
codegen_flags: <defaults>
</compile_context>

<pallas_src>
import functools

import jax
import jax.numpy as jnp
from jax import lax
from jax.experimental import pallas as pl
from jax.experimental.pallas import tpu as pltpu


# --------------------------------------------------------------------------- #
# Kernel 1: masked image composition (get_cropped_tensor, pre-crop part)
#   masked = pixel_mean + mask * (image - pixel_mean)
# --------------------------------------------------------------------------- #
def _compose_kernel(img_ref, mean_ref, mask_ref, out_ref):
    # img_ref : (C, HW)     f32  -- whole image, resident across grid
    # mean_ref: (C, 1)      f32  -- per-channel pixel mean (hoisted, resident)
    # mask_ref: (TN, HW)    i8   -- block of masks (0/1)
    # out_ref : (TN, C, HW) f32  -- masked images for this block
    img = img_ref[...]
    mean = mean_ref[...]
    diff = img - mean                                   # (C, HW)
    m = mask_ref[...].astype(out_ref.dtype)             # (TN, HW)
    out_ref[...] = mean[None, :, :] + m[:, None, :] * diff[None, :, :]


def masked_compose(img2d, pixel_mean, masks_i8):
    """img2d: (C,HW) f32, pixel_mean: (C,1) f32, masks_i8: (N,HW) i8 -> (N,C,HW) f32."""
    C, HW = img2d.shape
    N = masks_i8.shape[0]
    # Toy size: all masks in a single grid step (amortizes the ~0.35us/step cost).
    # TODO(synk): for production N / image sizes, tile TN (and H rows) so that
    # resident image + double-buffered mask/output blocks fit the scoped VMEM
    # limit (v7x: 64 MiB physical / 32 MiB scoped default).
    TN = N
    return pl.pallas_call(
        _compose_kernel,
        out_shape=jax.ShapeDtypeStruct((N, C, HW), img2d.dtype),
        grid=(pl.cdiv(N, TN),),
        in_specs=[
            pl.BlockSpec((C, HW), lambda i: (0, 0)),     # resident image
            pl.BlockSpec((C, 1), lambda i: (0, 0)),      # resident pixel mean
            pl.BlockSpec((TN, HW), lambda i: (i, 0)),    # mask block
        ],
        out_specs=pl.BlockSpec((TN, C, HW), lambda i: (i, 0, 0)),
        compiler_params=pltpu.CompilerParams(dimension_semantics=("parallel",)),
    )(img2d, pixel_mean, masks_i8)


# --------------------------------------------------------------------------- #
# Kernel 2 (fused): feature ensembles + cosine similarity + argmax + mask pick
#   (get_visual_feature + get_text_ensemble + get_max_index + pred_masks[idx])
# --------------------------------------------------------------------------- #
def _sim_select_kernel(maskf_ref, cropf_ref, phrase_ref, class_ref, masks_ref,
                       sims_ref, idx_ref, sel_ref, *, alpha, beta):
    # maskf_ref, cropf_ref : (N, D)  f32
    # phrase_ref, class_ref: (1, D)  f32
    # masks_ref            : (N, HW) i8
    # sims_ref             : (N, 1)  f32  (VMEM)
    # idx_ref              : (1,)    i32  (SMEM)
    # sel_ref              : (1, HW) image dtype (VMEM) -- pred_masks[idx]
    vis = alpha * maskf_ref[...] + (1.0 - alpha) * cropf_ref[...]      # (N, D)
    txt = beta * phrase_ref[...] + (1.0 - beta) * class_ref[...]       # (1, D)

    # cosine similarity without normalizing the full (N, D) matrix:
    dot = jnp.sum(vis * txt, axis=-1, keepdims=True)                   # (N, 1)
    vnorm2 = jnp.sum(vis * vis, axis=-1, keepdims=True)                # (N, 1)
    tnorm2 = jnp.sum(txt * txt, axis=-1, keepdims=True)                # (1, 1)
    sims = dot * lax.rsqrt(vnorm2) * lax.rsqrt(tnorm2)                 # (N, 1)
    sims_ref[...] = sims

    n = sims.shape[0]
    row_ids = lax.broadcasted_iota(jnp.int32, (n, 1), 0)
    max_val = jnp.max(sims)
    # NaN-safe first-argmax: fill non-matches with n-1 so the index is always
    # in range even if sims contains NaN (no out-of-bounds selection possible).
    idx = jnp.min(jnp.where(sims == max_val, row_ids, jnp.int32(n - 1)))
    idx_ref[0] = idx.astype(jnp.int32)

    # Select pred_masks[idx] without a second pallas_call: one-hot reduce over
    # the (tiny) resident mask block; fully vectorized VPU/XLU work.
    onehot = (row_ids == idx).astype(jnp.float32)                      # (N, 1)
    masks_f = masks_ref[...].astype(jnp.float32)                       # (N, HW)
    sel_ref[...] = jnp.sum(onehot * masks_f, axis=0,
                           keepdims=True).astype(sel_ref.dtype)        # (1, HW)


def similarity_select(mask_feat, crop_feat, phrase_feat, class_feat,
                      masks_i8, alpha, beta, out_dtype):
    """Returns (sims (N,1) f32, idx (1,) i32, selected mask (1,HW) out_dtype)."""
    N, D = mask_feat.shape
    HW = masks_i8.shape[1]
    kernel = functools.partial(_sim_select_kernel,
                               alpha=float(alpha), beta=float(beta))
    sims, idx, sel = pl.pallas_call(
        kernel,
        out_shape=(
            jax.ShapeDtypeStruct((N, 1), jnp.float32),
            jax.ShapeDtypeStruct((1,), jnp.int32),
            jax.ShapeDtypeStruct((1, HW), out_dtype),
        ),
        in_specs=[pl.BlockSpec(memory_space=pltpu.MemorySpace.VMEM)] * 5,
        out_specs=(
            pl.BlockSpec(memory_space=pltpu.MemorySpace.VMEM),
            pl.BlockSpec(memory_space=pltpu.MemorySpace.SMEM),
            pl.BlockSpec(memory_space=pltpu.MemorySpace.VMEM),
        ),
    )(mask_feat, crop_feat, phrase_feat.reshape(1, D),
      class_feat.reshape(1, D), masks_i8)
    return sims, idx, sel


# --------------------------------------------------------------------------- #
# Forward wrapper (mirrors ZeroShotRIS.forward with num_masks=1,
# return_similarity=False, no caching)
# --------------------------------------------------------------------------- #
@functools.partial(jax.jit, static_argnames=("alpha", "beta"))
def zero_shot_ris_forward(image_input, pred_boxes, pred_masks,
                          mask_features, crop_features,
                          phrase_features, class_features,
                          alpha=0.95, beta=0.5):
    # image_input: (1, C, H, W) or (C, H, W) f32
    image = image_input[0] if image_input.ndim == 4 else image_input
    del pred_boxes  # only consumed by the (untranslatable) crop/resize + CLIP path

    C, H, W = image.shape
    N = pred_masks.shape[0]
    HW = H * W

    # Free layout plumbing: flatten spatial dims so H*W sits on the lane axis.
    img2d = image.reshape(C, HW)
    masks_i8 = pred_masks.reshape(N, HW).astype(jnp.int8)  # bool -> i8 (1 byte)
    # Hoisted per-channel pixel mean (invariant across masks; tiny JAX op).
    pixel_mean = jnp.mean(img2d, axis=1, keepdims=True)    # (C, 1)

    # get_cropped_tensor hot path (elementwise compose), kernel 1.
    masked_images = masked_compose(img2d, pixel_mean, masks_i8).reshape(N, C, H, W)
    # TODO(synk): TF.resized_crop(masked_images, box) + CLIP image encoder would
    # produce crop_features here; they are synthetic inputs instead.

    # get_visual_feature + get_text_ensemble + get_max_index + pred_masks[idx],
    # fused into kernel 2.
    sims, max_idx, sel_flat = similarity_select(
        mask_features, crop_features, phrase_features, class_features,
        masks_i8, alpha, beta, out_dtype=image.dtype)

    # pred_masks[max_idx].reshape(-1, 1, H, W).to(image dtype)
    selected = sel_flat.reshape(-1, 1, H, W)
    return selected, max_idx, sims, masked_images


# --------------------------------------------------------------------------- #
# Main
# --------------------------------------------------------------------------- #
if __name__ == "__main__":
    key = jax.random.PRNGKey(0)
    kimg, kmask, kbox, kmf, kcf, kpf, kcl = jax.random.split(key, 7)

    C, H, W = 3, 16, 16        # small image
    N_MASKS = 8                # number of FreeSOLO mask proposals
    D = 128                    # CLIP embedding dim
    ALPHA, BETA = 0.95, 0.5

    image_input = jax.random.uniform(kimg, (1, C, H, W), dtype=jnp.float32)
    pred_masks = jax.random.uniform(kmask, (N_MASKS, H, W)) > 0.5          # bool
    pred_boxes = jax.random.randint(kbox, (N_MASKS, 4), 0, 16, jnp.int32)  # unused
    mask_features = jax.random.normal(kmf, (N_MASKS, D), dtype=jnp.float32)
    crop_features = jax.random.normal(kcf, (N_MASKS, D), dtype=jnp.float32)
    phrase_features = jax.random.normal(kpf, (D,), dtype=jnp.float32)
    class_features = jax.random.normal(kcl, (D,), dtype=jnp.float32)

    selected, max_idx, sims, masked_images = jax.block_until_ready(
        zero_shot_ris_forward(image_input, pred_boxes, pred_masks,
                              mask_features, crop_features,
                              phrase_features, class_features,
                              alpha=ALPHA, beta=BETA))

    # ---- plain-JAX reference check ----
    img = image_input[0]
    m = pred_masks.astype(jnp.float32)
    pix_mean = img.mean(axis=(1, 2), keepdims=True)
    ref_masked = img[None] * m[:, None] + (1.0 - m[:, None]) * pix_mean[None]
    vis = ALPHA * mask_features + (1.0 - ALPHA) * crop_features
    txt = BETA * phrase_features + (1.0 - BETA) * class_features
    vis_n = vis / jnp.linalg.norm(vis, axis=-1, keepdims=True)
    txt_n = txt / jnp.linalg.norm(txt)
    ref_sims = vis_n @ txt_n
    ref_idx = jnp.argmax(ref_sims)
    ref_selected = m[ref_idx].reshape(-1, 1, H, W)

    assert int(max_idx[0]) == int(ref_idx), (max_idx, ref_idx)
    assert jnp.allclose(sims[:, 0], ref_sims, atol=1e-5)
    assert jnp.allclose(masked_images, ref_masked, atol=1e-5)
    assert jnp.allclose(selected, ref_selected)
    assert selected.shape == (1, 1, H, W) and selected.dtype == image_input.dtype

    print("KERNEL_OK")
</pallas_src>

<mosaic_0001>
module attributes {stable_mosaic.version = 11 : i64} {
  func.func @_sim_select_kernel(%arg0: memref<8x128xf32, #tpu.memory_space<vmem>>, %arg1: memref<8x128xf32, #tpu.memory_space<vmem>>, %arg2: memref<1x128xf32, #tpu.memory_space<vmem>>, %arg3: memref<1x128xf32, #tpu.memory_space<vmem>>, %arg4: memref<8x256xi8, #tpu.memory_space<vmem>>, %arg5: memref<8x1xf32, #tpu.memory_space<vmem>>, %arg6: memref<1xi32, #tpu.memory_space<smem>>, %arg7: memref<1x256xf32, #tpu.memory_space<vmem>>) attributes {dimension_semantics = [], scalar_prefetch = 0 : i64, scratch_operands = 0 : i64, tpu.core_type = #tpu.core_type<tc>} {
    %c0 = arith.constant 0 : index
    %c0_0 = arith.constant 0 : index
    %0 = vector.load %arg0[%c0, %c0_0] : memref<8x128xf32, #tpu.memory_space<vmem>>, vector<8x128xf32>
    %cst = arith.constant 0.949999988 : f32
    %1 = vector.broadcast %cst : f32 to vector<8x128xf32>
    %2 = arith.mulf %1, %0 : vector<8x128xf32>
    %c0_1 = arith.constant 0 : index
    %c0_2 = arith.constant 0 : index
    %3 = vector.load %arg1[%c0_1, %c0_2] : memref<8x128xf32, #tpu.memory_space<vmem>>, vector<8x128xf32>
    %cst_3 = arith.constant 5.000000e-02 : f32
    %4 = vector.broadcast %cst_3 : f32 to vector<8x128xf32>
    %5 = arith.mulf %4, %3 : vector<8x128xf32>
    %6 = arith.addf %2, %5 : vector<8x128xf32>
    %c0_4 = arith.constant 0 : index
    %c0_5 = arith.constant 0 : index
    %7 = vector.load %arg2[%c0_4, %c0_5] : memref<1x128xf32, #tpu.memory_space<vmem>>, vector<1x128xf32>
    %cst_6 = arith.constant 5.000000e-01 : f32
    %8 = vector.broadcast %cst_6 : f32 to vector<1x128xf32>
    %9 = arith.mulf %8, %7 : vector<1x128xf32>
    %c0_7 = arith.constant 0 : index
    %c0_8 = arith.constant 0 : index
    %10 = vector.load %arg3[%c0_7, %c0_8] : memref<1x128xf32, #tpu.memory_space<vmem>>, vector<1x128xf32>
    %cst_9 = arith.constant 5.000000e-01 : f32
    %11 = vector.broadcast %cst_9 : f32 to vector<1x128xf32>
    %12 = arith.mulf %11, %10 : vector<1x128xf32>
    %13 = arith.addf %9, %12 : vector<1x128xf32>
    %14 = vector.broadcast %13 : vector<1x128xf32> to vector<8x128xf32>
    %15 = arith.mulf %6, %14 : vector<8x128xf32>
    %cst_10 = arith.constant dense<0.000000e+00> : vector<8xf32>
    %16 = vector.multi_reduction <add>, %15, %cst_10 [1] : vector<8x128xf32> to vector<8xf32>
    %17 = vector.shape_cast %16 : vector<8xf32> to vector<8x1xf32>
    %18 = arith.mulf %6, %6 : vector<8x128xf32>
    %cst_11 = arith.constant dense<0.000000e+00> : vector<8xf32>
    %19 = vector.multi_reduction <add>, %18, %cst_11 [1] : vector<8x128xf32> to vector<8xf32>
    %20 = vector.shape_cast %19 : vector<8xf32> to vector<8x1xf32>
    %21 = arith.mulf %13, %13 : vector<1x128xf32>
    %cst_12 = arith.constant dense<0.000000e+00> : vector<1xf32>
    %22 = vector.multi_reduction <add>, %21, %cst_12 [1] : vector<1x128xf32> to vector<1xf32>
    %23 = vector.shape_cast %22 : vector<1xf32> to vector<1x1xf32>
    %24 = math.rsqrt %20 : vector<8x1xf32>
    %25 = arith.mulf %17, %24 : vector<8x1xf32>
    %26 = math.rsqrt %23 : vector<1x1xf32>
    %27 = vector.broadcast %26 : vector<1x1xf32> to vector<8x1xf32>
    %28 = arith.mulf %25, %27 : vector<8x1xf32>
    %c0_13 = arith.constant 0 : index
    %c0_14 = arith.constant 0 : index
    %29 = vector.load %arg5[%c0_13, %c0_14] : memref<8x1xf32, #tpu.memory_space<vmem>>, vector<8x1xf32>
    tpu.vector_store %arg5[%c0_13, %c0_14], %28 {strides = array<i32>} : memref<8x1xf32, #tpu.memory_space<vmem>>, vector<8x1xf32>,
    %30 = tpu.iota {dimensions = array<i32: 0>} : vector<8x1xi32>
    %31 = vector.shape_cast %28 : vector<8x1xf32> to vector<1x8x1xf32>
    %cst_15 = arith.constant dense<0xFF800000> : vector<1xf32>
    %32 = vector.multi_reduction <maximumf>, %31, %cst_15 [1, 2] : vector<1x8x1xf32> to vector<1xf32>
    %33 = vector.shape_cast %32 : vector<1xf32> to vector<1x1x1xf32>
    %34 = vector.extract %33[0, 0, 0] : f32 from vector<1x1x1xf32>
    %35 = vector.broadcast %34 : f32 to vector<8x1xf32>
    %36 = arith.cmpf oeq, %28, %35 : vector<8x1xf32>
    %c7_i32 = arith.constant 7 : i32
    %37 = vector.broadcast %c7_i32 : i32 to vector<8x1xi32>
    %38 = arith.select %36, %30, %37 : vector<8x1xi1>, vector<8x1xi32>
    %39 = vector.shape_cast %38 : vector<8x1xi32> to vector<1x8x1xi32>
    %cst_16 = arith.constant dense<2147483647> : vector<1xi32>
    %40 = vector.multi_reduction <minsi>, %39, %cst_16 [1, 2] : vector<1x8x1xi32> to vector<1xi32>
    %41 = vector.shape_cast %40 : vector<1xi32> to vector<1x1x1xi32>
    %42 = vector.extract %41[0, 0, 0] : i32 from vector<1x1x1xi32>
    %c0_17 = arith.constant 0 : index
    %43 = memref.load %arg6[%c0_17] : memref<1xi32, #tpu.memory_space<smem>>
    memref.store %42, %arg6[%c0_17] : memref<1xi32, #tpu.memory_space<smem>>
    %44 = vector.broadcast %42 : i32 to vector<8x1xi32>
    %45 = arith.cmpi eq, %30, %44 : vector<8x1xi32>
    %46 = arith.extui %45 : vector<8x1xi1> to vector<8x1xi32>
    %47 = arith.sitofp %46 : vector<8x1xi32> to vector<8x1xf32>
    %c0_18 = arith.constant 0 : index
    %c0_19 = arith.constant 0 : index
    %48 = vector.load %arg4[%c0_18, %c0_19] : memref<8x256xi8, #tpu.memory_space<vmem>>, vector<8x256xi8>
    %49 = arith.sitofp %48 : vector<8x256xi8> to vector<8x256xf32>
    %50 = vector.broadcast %47 : vector<8x1xf32> to vector<8x256xf32>
    %51 = arith.mulf %50, %49 : vector<8x256xf32>
    %cst_20 = arith.constant dense<0.000000e+00> : vector<256xf32>
    %52 = vector.multi_reduction <add>, %51, %cst_20 [0] : vector<8x256xf32> to vector<256xf32>
    %53 = vector.shape_cast %52 : vector<256xf32> to vector<1x256xf32>
    %c0_21 = arith.constant 0 : index
    %c0_22 = arith.constant 0 : index
    %54 = vector.load %arg7[%c0_21, %c0_22] : memref<1x256xf32, #tpu.memory_space<vmem>>, vector<1x256xf32>
    tpu.vector_store %arg7[%c0_21, %c0_22], %53 {strides = array<i32>} : memref<1x256xf32, #tpu.memory_space<vmem>>, vector<1x256xf32>,
    return
  }
}

module attributes {stable_mosaic.version = 11 : i64} {
  func.func @_compose_kernel(%arg0: i32, %arg1: memref<3x256xf32, #tpu.memory_space<vmem>>, %arg2: memref<3x1xf32, #tpu.memory_space<vmem>>, %arg3: memref<8x256xi8, #tpu.memory_space<vmem>>, %arg4: memref<8x3x256xf32, #tpu.memory_space<vmem>>) attributes {dimension_semantics = [#tpu.dimension_semantics<parallel>], iteration_bounds = array<i64: 1>, scalar_prefetch = 0 : i64, scratch_operands = 0 : i64, tpu.core_type = #tpu.core_type<tc>, window_params = [{pipeline_mode = #tpu.pipeline_mode<synchronous>, transform_indices = @transform_0, window_bounds = array<i64: 3, 256>}, {pipeline_mode = #tpu.pipeline_mode<synchronous>, transform_indices = @transform_1, window_bounds = array<i64: 3, 1>}, {transform_indices = @transform_2, window_bounds = array<i64: 8, 256>}, {transform_indices = @transform_3, window_bounds = array<i64: 8, 3, 256>}]} {
    %c0 = arith.constant 0 : index
    %c0_0 = arith.constant 0 : index
    %0 = vector.load %arg1[%c0, %c0_0] : memref<3x256xf32, #tpu.memory_space<vmem>>, vector<3x256xf32>
    %c0_1 = arith.constant 0 : index
    %c0_2 = arith.constant 0 : index
    %1 = vector.load %arg2[%c0_1, %c0_2] : memref<3x1xf32, #tpu.memory_space<vmem>>, vector<3x1xf32>
    %2 = vector.broadcast %1 : vector<3x1xf32> to vector<3x256xf32>
    %3 = arith.subf %0, %2 : vector<3x256xf32>
    %c0_3 = arith.constant 0 : index
    %c0_4 = arith.constant 0 : index
    %4 = vector.load %arg3[%c0_3, %c0_4] : memref<8x256xi8, #tpu.memory_space<vmem>>, vector<8x256xi8>
    %5 = arith.sitofp %4 : vector<8x256xi8> to vector<8x256xf32>
    %6 = vector.shape_cast %1 : vector<3x1xf32> to vector<1x3x1xf32>
    %7 = vector.shape_cast %5 : vector<8x256xf32> to vector<8x1x256xf32>
    %8 = vector.shape_cast %3 : vector<3x256xf32> to vector<1x3x256xf32>
    %9 = vector.broadcast %7 : vector<8x1x256xf32> to vector<8x3x256xf32>
    %10 = vector.broadcast %8 : vector<1x3x256xf32> to vector<8x3x256xf32>
    %11 = arith.mulf %9, %10 : vector<8x3x256xf32>
    %12 = vector.broadcast %6 : vector<1x3x1xf32> to vector<8x3x256xf32>
    %13 = arith.addf %12, %11 : vector<8x3x256xf32>
    %c0_5 = arith.constant 0 : index
    %c0_6 = arith.constant 0 : index
    %c0_7 = arith.constant 0 : index
    %14 = vector.load %arg4[%c0_5, %c0_6, %c0_7] : memref<8x3x256xf32, #tpu.memory_space<vmem>>, vector<8x3x256xf32>
    tpu.vector_store %arg4[%c0_5, %c0_6, %c0_7], %13 {strides = array<i32>} : memref<8x3x256xf32, #tpu.memory_space<vmem>>, vector<8x3x256xf32>,
    return
  }
  func.func @transform_0(%arg0: i32) -> (i32, i32) {
    %c0_i32 = arith.constant 0 : i32
    %c0_i32_0 = arith.constant 0 : i32
    %c0_i32_1 = arith.constant 0 : i32
    return %c0_i32, %c0_i32_0 : i32, i32
  }
  func.func @transform_1(%arg0: i32) -> (i32, i32) {
    %c0_i32 = arith.constant 0 : i32
    %c0_i32_0 = arith.constant 0 : i32
    %c0_i32_1 = arith.constant 0 : i32
    return %c0_i32, %c0_i32_0 : i32, i32
  }
  func.func @transform_2(%arg0: i32) -> (i32, i32) {
    %c0_i32 = arith.constant 0 : i32
    %c0_i32_0 = arith.constant 0 : i32
    return %arg0, %c0_i32 : i32, i32
  }
  func.func @transform_3(%arg0: i32) -> (i32, i32, i32) {
    %c0_i32 = arith.constant 0 : i32
    %c0_i32_0 = arith.constant 0 : i32
    %c0_i32_1 = arith.constant 0 : i32
    return %arg0, %c0_i32, %c0_i32_0 : i32, i32, i32
  }
}

</mosaic_0001>

<llo_original>
// kernel: squeeze.1
$region0: #{squeeze.1}
  %s0 = inlined_call_operand.vmem [shape: f32[1,3,16,16], index: 0, kind: input, shape index: {}]
  %s1 = inlined_call_operand.vmem [shape: f32[3,256], index: 1, kind: output, shape index: {}]
  $region1: #{squeeze.1} parent=0
    #allocation0 [shape = 'u8[8192]{0}', space=vmem, size = 0x2000, scoped, tag = 'scoped mem for output reshape']
    %v2 = vld [vmem:[%s0] ss:$8 sm:$0xf]
    %s3 = smov 48
    %v4 = vld [vmem:[%s0] ss:$8 sm:%s3]
    %vm5 = vcmask 1045508
    %v6 = vsel %vm5, %v4, %v2
    %vm7 = vcmask 130048
    %8 = vst.msk [vmem:[#allocation0] ss:$8 sm:$0x3] %vm7, %v6
    %s9 = scalar_lea.vmem [#allocation0], 4294967281
    %10 = vst.msk [vmem:[%s9] ss:$8 sm:$0xc] %vm7, %v6
    %s11 = scalar_lea.vmem [#allocation0], 4294967266
    %12 = vst.msk [vmem:[%s11] ss:$8 sm:$0x30] %vm7, %v6
    %s13 = scalar_lea.vmem %s0, 7
    %s14 = smov 3
    %v15 = vld [vmem:[%s13] ss:$16 sm:%s14]
    %s16 = scalar_lea.vmem %s0, 87
    %s17 = smov 12
    %v18 = vld [vmem:[%s16] ss:$-24 sm:%s17]
    %vm19 = vcmask 1043458
    %v20 = vsel %vm19, %v18, %v15
    %s21 = scalar_lea.vmem %s0, 4294967263
    %s22 = smov 48
    %v23 = vld [vmem:[%s21] ss:$16 sm:%s22]
    %vm24 = vcmask 1045508
    %v25 = vsel %vm24, %v23, %v20
    %26 = vrot.lane.b32.xlu0 %v25, 112
    %v27 = vpop.permute.xlu0 %26
    %vm28 = vcmask 1048448
    %29 = vst.msk [vmem:[#allocation0] sm:$0x7] %vm28, %v27
    %s30 = scalar_lea.vmem [#allocation0], 5
    %31 = vst.msk [vmem:[%s30] sm:$0x38] %vm28, %v27
    %s32 = scalar_lea.vmem %s0, 6
    %s33 = smov 3
    %v34 = vld [vmem:[%s32] ss:$16 sm:%s33]
    %s35 = scalar_lea.vmem %s0, 86
    %s36 = smov 12
    %v37 = vld [vmem:[%s35] ss:$-24 sm:%s36]
    %vm38 = vcmask 1043458
    %v39 = vsel %vm38, %v37, %v34
    %s40 = scalar_lea.vmem %s0, 4294967262
    %s41 = smov 48
    %v42 = vld [vmem:[%s40] ss:$16 sm:%s41]
    %vm43 = vcmask 1045508
    %v44 = vsel %vm43, %v42, %v39
    %45 = vrot.lane.b32.xlu0 %v44, 96
    %v46 = vpop.permute.xlu0 %45
    %vm47 = vcmask 917248
    %48 = vst.msk [vmem:[#allocation0] sm:$0x7] %vm47, %v46
    %s49 = scalar_lea.vmem [#allocation0], 5
    %50 = vst.msk [vmem:[%s49] sm:$0x38] %vm47, %v46
    %s51 = scalar_lea.vmem %s0, 5
    %s52 = smov 3
    %v53 = vld [vmem:[%s51] ss:$16 sm:%s52]
    %s54 = scalar_lea.vmem %s0, 85
    %s55 = smov 12
    %v56 = vld [vmem:[%s54] ss:$-24 sm:%s55]
    %vm57 = vcmask 1043458
    %v58 = vsel %vm57, %v56, %v53
    %s59 = scalar_lea.vmem %s0, 4294967261
    %s60 = smov 48
    %v61 = vld [vmem:[%s59] ss:$16 sm:%s60]
    %vm62 = vcmask 1045508
    %v63 = vsel %vm62, %v61, %v58
    %64 = vrot.lane.b32.xlu0 %v63, 80
    %v65 = vpop.permute.xlu0 %64
    %vm66 = vcmask 786048
    %67 = vst.msk [vmem:[#allocation0] sm:$0x7] %vm66, %v65
    %s68 = scalar_lea.vmem [#allocation0], 5
    %69 = vst.msk [vmem:[%s68] sm:$0x38] %vm66, %v65
    %s70 = scalar_lea.vmem %s0, 4
    %s71 = smov 3
    %v72 = vld [vmem:[%s70] ss:$16 sm:%s71]
    %s73 = scalar_lea.vmem %s0, 84
    %s74 = smov 12
    %v75 = vld [vmem:[%s73] ss:$-24 sm:%s74]
    %vm76 = vcmask 1043458
    %v77 = vsel %vm76, %v75, %v72
    %s78 = scalar_lea.vmem %s0, 4294967260
    %s79 = smov 48
    %v80 = vld [vmem:[%s78] ss:$16 sm:%s79]
    %vm81 = vcmask 1045508
    %v82 = vsel %vm81, %v80, %v77
    %83 = vrot.lane.b32.xlu0 %v82, 64
    %v84 = vpop.permute.xlu0 %83
    %vm85 = vcmask 654848
    %86 = vst.msk [vmem:[#allocation0] sm:$0x7] %vm85, %v84
    %s87 = scalar_lea.vmem [#allocation0], 5
    %88 = vst.msk [vmem:[%s87] sm:$0x38] %vm85, %v84
    %s89 = scalar_lea.vmem %s0, 3
    %s90 = smov 3
    %v91 = vld [vmem:[%s89] ss:$16 sm:%s90]
    %s92 = scalar_lea.vmem %s0, 83
    %s93 = smov 12
    %v94 = vld [vmem:[%s92] ss:$-24 sm:%s93]
    %vm95 = vcmask 1043458
    %v96 = vsel %vm95, %v94, %v91
    %s97 = scalar_lea.vmem %s0, 4294967259
    %s98 = smov 48
    %v99 = vld [vmem:[%s97] ss:$16 sm:%s98]
    %vm100 = vcmask 1045508
    %v101 = vsel %vm100, %v99, %v96
    %102 = vrot.lane.b32.xlu0 %v101, 48
    %v103 = vpop.permute.xlu0 %102
    %vm104 = vcmask 523648
    %105 = vst.msk [vmem:[#allocation0] sm:$0x7] %vm104, %v103
    %s106 = scalar_lea.vmem [#allocation0], 5
    %107 = vst.msk [vmem:[%s106] sm:$0x38] %vm104, %v103
    %s108 = scalar_lea.vmem %s0, 2
    %s109 = smov 3
    %v110 = vld [vmem:[%s108] ss:$16 sm:%s109]
    %s111 = scalar_lea.vmem %s0, 82
    %s112 = smov 12
    %v113 = vld [vmem:[%s111] ss:$-24 sm:%s112]
    %vm114 = vcmask 1043458
    %v115 = vsel %vm114, %v113, %v110
    %s116 = scalar_lea.vmem %s0, 4294967258
    %s117 = smov 48
    %v118 = vld [vmem:[%s116] ss:$16 sm:%s117]
    %vm119 = vcmask 1045508
    %v120 = vsel %vm119, %v118, %v115
    %121 = vrot.lane.b32.xlu0 %v120, 32
    %v122 = vpop.permute.xlu0 %121
    %vm123 = vcmask 392448
    %124 = vst.msk [vmem:[#allocation0] sm:$0x7] %vm123, %v122
    %s125 = scalar_lea.vmem [#allocation0], 5
    %126 = vst.msk [vmem:[%s125] sm:$0x38] %vm123, %v122
    %s127 = scalar_lea.vmem %s0, 1
    %s128 = smov 3
    %v129 = vld [vmem:[%s127] ss:$16 sm:%s128]
    %s130 = scalar_lea.vmem %s0, 81
    %s131 = smov 12
    %v132 = vld [vmem:[%s130] ss:$-24 sm:%s131]
    %vm133 = vcmask 1043458
    %v134 = vsel %vm133, %v132, %v129
    %s135 = scalar_lea.vmem %s0, 4294967257
    %s136 = smov 48
    %v137 = vld [vmem:[%s135] ss:$16 sm:%s136]
    %vm138 = vcmask 1045508
    %v139 = vsel %vm138, %v137, %v134
    %140 = vrot.lane.b32.xlu0 %v139, 16
    %v141 = vpop.permute.xlu0 %140
    %vm142 = vcmask 261248
    %143 = vst.msk [vmem:[#allocation0] sm:$0x7] %vm142, %v141
    %s144 = scalar_lea.vmem [#allocation0], 5
    %145 = vst.msk [vmem:[%s144] sm:$0x38] %vm142, %v141
    %s147 = sshllo.u32 0, 4
    %v149 = vld [vmem:[#allocation0] sm:%s147]
    %s150 = sshllo.u32 0, 4
    %151 = vst [vmem:[%s1] sm:%s150] %v149
    %s152 = scalar_lea.vmem [#allocation0], 8
    %v153 = vld [vmem:[%s152] sm:%s147]
    %s154 = sshllo.u32 0, 4
    %s155 = scalar_lea.vmem %s1, 4
    %156 = vst [vmem:[%s155] sm:%s154] %v153

// kernel: zero_shot_ris_forward.2
$region0: #{zero_shot_ris_forward.2}
  #allocation0 [shape = 'u32[]', space=smem, size = 0x4, offset = 0x4, fixed_abs, tag = 'smem constant byte address 0x4 - core index']
  #allocation1 [shape = 'u32[144,128]{1,0:T(1,128)}', space=vmem, size = 0x12000, scoped, tag = 'internal scratch']
  %s0 = inlined_call_operand.vmem [shape: f32[3,256], index: 0, kind: input, shape index: {}]
  %s1 = inlined_call_operand.vmem [shape: f32[3,1], index: 1, kind: input, shape index: {}]
  %s2 = inlined_call_operand.vmem [shape: s8[8,256], index: 2, kind: input, shape index: {}]
  %s3 = inlined_call_operand.vmem [shape: f32[8,3,256], index: 3, kind: output, shape index: {}]
  %s4 = sld [smem:[#allocation0]]
  $region22: #{zero_shot_ris_forward.2} parent=0
    _
  %s6 = ssub.s32 1, %s4
  %s7 = scalar_select 0, %s6, %s4
  // Predicated region
  $region2: #{zero_shot_ris_forward.2} parent=0 // pred_check
    _
  $region3: #{zero_shot_ris_forward.2} parent=0 // pred_check_branch
    %9 = sbr.rel (0) target = $region5
  $region4: #{zero_shot_ris_forward.2} parent=0 // pred_region
    _
  $region5: #{zero_shot_ris_forward.2} parent=0 // pred_fallthru
    _
  // Predicated region
  $region6: #{zero_shot_ris_forward.2} parent=0 // pred_check
    _
  $region7: #{zero_shot_ris_forward.2} parent=0 // pred_check_branch
    %11 = sbr.rel (0) target = $region9
  $region8: #{zero_shot_ris_forward.2} parent=0 // pred_region
    _
  $region9: #{zero_shot_ris_forward.2} parent=0 // pred_fallthru
    _
  // Predicated region
  $region10: #{zero_shot_ris_forward.2} parent=0 // pred_check
    _
  $region11: #{zero_shot_ris_forward.2} parent=0 // pred_check_branch
    %13 = sbr.rel (0) target = $region13
  $region12: #{zero_shot_ris_forward.2} parent=0 // pred_region
    _
  $region13: #{zero_shot_ris_forward.2} parent=0 // pred_fallthru
    _
  %v14 = vld [vmem:[%s0] sm:$0x77]
  %v15 = vld [vmem:[%s1] sm:$0x7]
  %17 = vset.pattern.permute.xlu0 0
  %18 = vperm.xlu0 %17, %v15
  %v19 = vpop.permute.xlu0 %18
  %v21 = vunpack.c.l.s4 839922192
  %v22 = vunpack.c.0.s8 %v21
  %v23 = vlaneseq
  %v24 = vshrl.u32 %v23, 7
  %v25 = vsub.s32 %v22, %v24
  %v26 = vrot.slane %v19, %v25
  %v28 = vsub.f32 %v14, %v26
  %v29 = vld [vmem:[%s2] sm:$0xf]
  %v30 = vunpack.c.0.s8 %v29
  %v31 = vunpack.c.1.s8 %v29
  %v32 = vcvt.s32.f32 %v30
  %v33 = vcvt.s32.f32 %v31
  %v36 = vcombine.low %v32, %v33
  %v37 = vcombine.high %v32, %v33
  %v39 = vunpack.c.l.s4 1966171168
  %v40 = vunpack.c.0.s8 %v39
  %v41 = vlaneseq
  %v42 = vshrl.u32 %v41, 7
  %v43 = vsub.s32 %v40, %v42
  %v44 = vrot.slane %v36, %v43
  %v46 = vunpack.c.l.s4 1966171168
  %v47 = vunpack.c.0.s8 %v46
  %v48 = vlaneseq
  %v49 = vshrl.u32 %v48, 7
  %v50 = vsub.s32 %v47, %v49
  %v51 = vrot.slane %v37, %v50
  %v52 = vcombine.high %v44, %v44
  %v53 = vcombine.high %v51, %v51
  %v55 = vunpack.c.l.s4 1966171168
  %v56 = vunpack.c.0.s8 %v55
  %v57 = vlaneseq
  %v58 = vshrl.u32 %v57, 7
  %v59 = vsub.s32 %v56, %v58
  %v60 = vrot.slane %v44, %v59
  %v62 = vunpack.c.l.s4 1966171168
  %v63 = vunpack.c.0.s8 %v62
  %v64 = vlaneseq
  %v65 = vshrl.u32 %v64, 7
  %v66 = vsub.s32 %v63, %v65
  %v67 = vrot.slane %v51, %v66
  %v69 = vunpack.c.l.s4 1966171168
  %v70 = vunpack.c.0.s8 %v69
  %v71 = vlaneseq
  %v72 = vshrl.u32 %v71, 7
  %v73 = vsub.s32 %v70, %v72
  %v74 = vrot.slane %v52, %v73
  %v76 = vunpack.c.l.s4 1966171168
  %v77 = vunpack.c.0.s8 %v76
  %v78 = vlaneseq
  %v79 = vshrl.u32 %v78, 7
  %v80 = vsub.s32 %v77, %v79
  %v81 = vrot.slane %v53, %v80
  %v82 = vcombine.high %v60, %v60
  %v83 = vcombine.high %v67, %v67
  %v84 = vcombine.high %v74, %v74
  %v85 = vcombine.high %v81, %v81
  %v86 = vlaneseq
  %v87 = vshrl.u32 %v86, 7
  %v88 = vsub.s32 0, %v87
  %v89 = vrot.slane %v60, %v88
  %v90 = vlaneseq
  %v91 = vshrl.u32 %v90, 7
  %v92 = vsub.s32 1, %v91
  %v93 = vrot.slane %v60, %v92
  %v94 = vlaneseq
  %v95 = vshrl.u32 %v94, 7
  %v96 = vsub.s32 0, %v95
  %v97 = vrot.slane %v74, %v96
  %v98 = vlaneseq
  %v99 = vshrl.u32 %v98, 7
  %v100 = vsub.s32 1, %v99
  %v101 = vrot.slane %v74, %v100
  %v102 = vlaneseq
  %v103 = vshrl.u32 %v102, 7
  %v104 = vsub.s32 0, %v103
  %v105 = vrot.slane %v82, %v104
  %v106 = vlaneseq
  %v107 = vshrl.u32 %v106, 7
  %v108 = vsub.s32 1, %v107
  %v109 = vrot.slane %v82, %v108
  %v110 = vlaneseq
  %v111 = vshrl.u32 %v110, 7
  %v112 = vsub.s32 0, %v111
  %v113 = vrot.slane %v84, %v112
  %v114 = vlaneseq
  %v115 = vshrl.u32 %v114, 7
  %v116 = vsub.s32 1, %v115
  %v117 = vrot.slane %v84, %v116
  %v118 = vlaneseq
  %v119 = vshrl.u32 %v118, 7
  %v120 = vsub.s32 0, %v119
  %v121 = vrot.slane %v67, %v120
  %v122 = vlaneseq
  %v123 = vshrl.u32 %v122, 7
  %v124 = vsub.s32 1, %v123
  %v125 = vrot.slane %v67, %v124
  %v126 = vlaneseq
  %v127 = vshrl.u32 %v126, 7
  %v128 = vsub.s32 0, %v127
  %v129 = vrot.slane %v81, %v128
  %v130 = vlaneseq
  %v131 = vshrl.u32 %v130, 7
  %v132 = vsub.s32 1, %v131
  %v133 = vrot.slane %v81, %v132
  %v134 = vlaneseq
  %v135 = vshrl.u32 %v134, 7
  %v136 = vsub.s32 0, %v135
  %v137 = vrot.slane %v83, %v136
  %v138 = vlaneseq
  %v139 = vshrl.u32 %v138, 7
  %v140 = vsub.s32 1, %v139
  %v141 = vrot.slane %v83, %v140
  %v142 = vlaneseq
  %v143 = vshrl.u32 %v142, 7
  %v144 = vsub.s32 0, %v143
  %v145 = vrot.slane %v85, %v144
  %v146 = vlaneseq
  %v147 = vshrl.u32 %v146, 7
  %v148 = vsub.s32 1, %v147
  %v149 = vrot.slane %v85, %v148
  %v167 = vcombine.high %v28, %v28
  %v169 = vmul.f32 %v89, %v28
  %v170 = vmul.f32 %v93, %v167
  %v171 = vmul.f32 %v97, %v28
  %v172 = vmul.f32 %v101, %v167
  %v173 = vmul.f32 %v105, %v28
  %v174 = vmul.f32 %v109, %v167
  %v175 = vmul.f32 %v113, %v28
  %v176 = vmul.f32 %v117, %v167
  %v177 = vmul.f32 %v121, %v28
  %v178 = vmul.f32 %v125, %v167
  %v179 = vmul.f32 %v129, %v28
  %v180 = vmul.f32 %v133, %v167
  %v181 = vmul.f32 %v137, %v28
  %v182 = vmul.f32 %v141, %v167
  %v183 = vmul.f32 %v145, %v28
  %v184 = vmul.f32 %v149, %v167
  %v186 = vadd.f32 %v19, %v169
  %v187 = vadd.f32 %v19, %v170
  %v188 = vadd.f32 %v19, %v171
  %v189 = vadd.f32 %v19, %v172
  %v190 = vadd.f32 %v19, %v173
  %v191 = vadd.f32 %v19, %v174
  %v192 = vadd.f32 %v19, %v175
  %v193 = vadd.f32 %v19, %v176
  %v194 = vadd.f32 %v19, %v177
  %v195 = vadd.f32 %v19, %v178
  %v196 = vadd.f32 %v19, %v179
  %v197 = vadd.f32 %v19, %v180
  %v198 = vadd.f32 %v19, %v181
  %v199 = vadd.f32 %v19, %v182
  %v200 = vadd.f32 %v19, %v183
  %v201 = vadd.f32 %v19, %v184
  %v218 = vcombine.low %v186, %v187
  %v219 = vcombine.low %v188, %v189
  %v220 = vcombine.low %v190, %v191
  %v221 = vcombine.low %v192, %v193
  %v222 = vcombine.low %v194, %v195
  %v223 = vcombine.low %v196, %v197
  %v224 = vcombine.low %v198, %v199
  %v225 = vcombine.low %v200, %v201
  %234 = vst [vmem:[%s3] sm:$0x77] %v218
  %235 = vst [vmem:[%s3 + $0x8] sm:$0x77] %v219
  %236 = vst [vmem:[%s3 + $0x10] sm:$0x77] %v220
  %237 = vst [vmem:[%s3 + $0x18] sm:$0x77] %v221
  %238 = vst [vmem:[%s3 + $0x20] sm:$0x77] %v222
  %239 = vst [vmem:[%s3 + $0x28] sm:$0x77] %v223
  %240 = vst [vmem:[%s3 + $0x30] sm:$0x77] %v224
  %241 = vst [vmem:[%s3 + $0x38] sm:$0x77] %v225
  // Predicated region
  $region14: #{zero_shot_ris_forward.2} parent=0 // pred_check
    _
  $region15: #{zero_shot_ris_forward.2} parent=0 // pred_check_branch
    %243 = sbr.rel (0) target = $region17
  $region16: #{zero_shot_ris_forward.2} parent=0 // pred_region
    _
  $region17: #{zero_shot_ris_forward.2} parent=0 // pred_fallthru
    _
  // Predicated region
  $region18: #{zero_shot_ris_forward.2} parent=0 // pred_check
    _
  $region19: #{zero_shot_ris_forward.2} parent=0 // pred_check_branch
    %245 = sbr.rel (0) target = $region21
  $region20: #{zero_shot_ris_forward.2} parent=0 // pred_region
    _
  $region21: #{zero_shot_ris_forward.2} parent=0 // pred_fallthru
    _

// kernel: zero_shot_ris_forward.3
$region0: #{zero_shot_ris_forward.3}
  #allocation0 [shape = 'u32[]', space=smem, size = 0x4, offset = 0x4, fixed_abs, tag = 'smem constant byte address 0x4 - core index']
  #allocation1 [shape = 'u32[144,128]{1,0:T(1,128)}', space=vmem, size = 0x12000, scoped, tag = 'internal scratch']
  %s0 = inlined_call_operand.vmem [shape: f32[8,128], index: 0, kind: input, shape index: {}]
  %s1 = inlined_call_operand.vmem [shape: f32[8,128], index: 1, kind: input, shape index: {}]
  %s2 = inlined_call_operand.vmem [shape: f32[1,128], index: 2, kind: input, shape index: {}]
  %s3 = inlined_call_operand.vmem [shape: f32[1,128], index: 3, kind: input, shape index: {}]
  %s4 = inlined_call_operand.vmem [shape: s8[8,256], index: 4, kind: input, shape index: {}]
  %s5 = inlined_call_operand.vmem [shape: f32[8,1], index: 5, kind: output, shape index: {0}]
  %s6 = inlined_call_operand.hbm [shape: s32[1], index: 6, kind: output, shape index: {1}]
  %s7 = inlined_call_operand.vmem [shape: f32[1,256], index: 7, kind: output, shape index: {2}]
  %8 = xla_tuple %s5, %s6, %s7
  %s9 = sld [smem:[#allocation0]]
  $region46: #{zero_shot_ris_forward.3} parent=0
    _
  %s11 = ssub.s32 1, %s9
  %s12 = scalar_select 0, %s11, %s9
  $region1: #{zero_shot_ris_forward.3} parent=0
    #allocation2 [shape = 'u8[512]{0}', space=smem, size = 0x200, scoped, tag = 'output window, operand 1, single buffered']
    #allocation3 [shape = 's32[1]{0}', space=sflag, size = 0x4, scoped, tag = 'scoped memory for zero_shot_ris_forward.3']
    %13 = vsyncpa [#allocation3], 0
    // Predicated region
    $region2: #{zero_shot_ris_forward.3} parent=1 // pred_check
      _
    $region3: #{zero_shot_ris_forward.3} parent=1 // pred_check_branch
      %15 = sbr.rel (0) target = $region5
    $region4: #{zero_shot_ris_forward.3} parent=1 // pred_region
      _
    $region5: #{zero_shot_ris_forward.3} parent=1 // pred_fallthru
      _
    // Predicated region
    $region6: #{zero_shot_ris_forward.3} parent=1 // pred_check
      _
    $region7: #{zero_shot_ris_forward.3} parent=1 // pred_check_branch
      %17 = sbr.rel (0) target = $region9
    $region8: #{zero_shot_ris_forward.3} parent=1 // pred_region
      _
    $region9: #{zero_shot_ris_forward.3} parent=1 // pred_fallthru
      _
    // Predicated region
    $region10: #{zero_shot_ris_forward.3} parent=1 // pred_check
      _
    $region11: #{zero_shot_ris_forward.3} parent=1 // pred_check_branch
      %19 = sbr.rel (0) target = $region13
    $region12: #{zero_shot_ris_forward.3} parent=1 // pred_region
      _
    $region13: #{zero_shot_ris_forward.3} parent=1 // pred_fallthru
      _
    // Predicated region
    $region14: #{zero_shot_ris_forward.3} parent=1 // pred_check
      _
    $region15: #{zero_shot_ris_forward.3} parent=1 // pred_check_branch
      %21 = sbr.rel (0) target = $region17
    $region16: #{zero_shot_ris_forward.3} parent=1 // pred_region
      _
    $region17: #{zero_shot_ris_forward.3} parent=1 // pred_fallthru
      _
    // Predicated region
    $region18: #{zero_shot_ris_forward.3} parent=1 // pred_check
      _
    $region19: #{zero_shot_ris_forward.3} parent=1 // pred_check_branch
      %23 = sbr.rel (0) target = $region21
    $region20: #{zero_shot_ris_forward.3} parent=1 // pred_region
      _
    $region21: #{zero_shot_ris_forward.3} parent=1 // pred_fallthru
      _
    %v24 = vld [vmem:[%s0] sm:$0xff]
    %v25 = vmul.f32 %v24, 0.95
    %v26 = vld [vmem:[%s1] sm:$0xff]
    %v27 = vmul.f32 %v26, 0.05
    %v28 = vadd.f32 %v25, %v27
    %v29 = vld [vmem:[%s2] sm:$0x1]
    %v30 = vmul.f32 %v29, 0.5
    %v31 = vld [vmem:[%s3] sm:$0x1]
    %v32 = vmul.f32 %v31, 0.5
    %v33 = vadd.f32 %v30, %v32
    %v35 = vlaneseq
    %v36 = vshrl.u32 %v35, 7
    %v37 = vsub.s32 0, %v36
    %v38 = vrot.slane %v33, %v37
    %v40 = vmul.f32 %v28, %v38
    %41 = vadd.xlane.f32.xlu0 %v40
    %v42 = vpop.xlane.xlu0 %41
    %v43 = vmul.f32 %v28, %v28
    %44 = vadd.xlane.f32.xlu0 %v43
    %v45 = vpop.xlane.xlu0 %44
    %v46 = vmul.f32 %v33, %v33
    %vm47 = vcmask 1040384
    %v48 = vsel %vm47, %v46, 0.0
    %49 = vadd.xlane.f32.xlu0 %v48
    %v50 = vpop.xlane.xlu0 %49
    %v51 = vrsqrt.pop %v45
    %v52 = vmul.f32 %v42, %v51
    %v53 = vrsqrt.pop %v50
    %v54 = vlaneseq
    %v55 = vshrl.u32 %v54, 7
    %v56 = vsub.s32 0, %v55
    %v57 = vrot.slane %v53, %v56
    %v58 = vmul.f32 %v52, %v57
    %vm59 = vcmask 7168
    %60 = vst.msk [vmem:[%s5] sm:$0xff] %vm59, %v58
    %v61 = vlaneseq
    %v62 = vshrl.u32 %v61, 7
    %v63 = vrot.slane %v58, 4
    %v64 = vmax.f32 %v58, %v63
    %v65 = vrot.slane %v64, 2
    %v66 = vmax.f32 %v64, %v65
    %v67 = vrot.slane %v66, 1
    %v68 = vmax.f32 %v66, %v67
    %s69 = vtos %v68
    %v70 = vstv %s69
    %vm71 = vcmp.eq.f32.partialorder %v58, %v70
    %v72 = vsel %vm71, %v62, 7
    %v73 = vrot.slane %v72, 4
    %vm74 = vcmp.lt.s32.totalorder %v72, %v73
    %v75 = vsel %vm74, %v72, %v73
    %v76 = vrot.slane %v75, 2
    %vm77 = vcmp.lt.s32.totalorder %v75, %v76
    %v78 = vsel %vm77, %v75, %v76
    %v79 = vrot.slane %v78, 1
    %vm80 = vcmp.lt.s32.totalorder %v78, %v79
    %v81 = vsel %vm80, %v78, %v79
    %s82 = vtos %v81
    %s83 = scalar_lea.smem [#allocation2], 0
    %84 = sst [smem:[%s83]] %s82
    %v85 = vstv %s82
    %vm86 = vcmp.eq.s32.totalorder %v62, %v85
    %v87 = vsel %vm86, 1, 0
    %v88 = vcvt.s32.f32 %v87
    %v89 = vld [vmem:[%s4] sm:$0xf]
    %v90 = vunpack.c.0.s8 %v89
    %v91 = vunpack.c.1.s8 %v89
    %v92 = vcvt.s32.f32 %v90
    %v93 = vcvt.s32.f32 %v91
    %v94 = vmul.f32 %v88, %v92
    %v95 = vmul.f32 %v88, %v93
    %v96 = vrot.slane %v94, 4
    %v97 = vadd.f32 %v94, %v96
    %v98 = vrot.slane %v97, 2
    %v99 = vadd.f32 %v97, %v98
    %v100 = vrot.slane %v99, 1
    %v101 = vadd.f32 %v99, %v100
    %v102 = vrot.slane %v95, 4
    %v103 = vadd.f32 %v95, %v102
    %v104 = vrot.slane %v103, 2
    %v105 = vadd.f32 %v103, %v104
    %v106 = vrot.slane %v105, 1
    %v107 = vadd.f32 %v105, %v106
    %v110 = vcombine.low %v101, %v107
    %v112 = vunpack.c.l.s4 1966171168
    %v113 = vunpack.c.0.s8 %v112
    %v114 = vlaneseq
    %v115 = vshrl.u32 %v114, 7
    %v116 = vsub.s32 %v113, %v115
    %v117 = vrot.slane %v110, %v116
    %v119 = vunpack.c.l.s4 1966171168
    %v120 = vunpack.c.0.s8 %v119
    %v121 = vlaneseq
    %v122 = vshrl.u32 %v121, 7
    %v123 = vsub.s32 %v120, %v122
    %v124 = vrot.slane %v117, %v123
    %v126 = vlaneseq
    %vm127 = vcmp.ge.s32.totalorder %v126, 0
    %vm128 = vcmp.lt.s32.totalorder %v126, 256
    %vm129 = vmand %vm127, %vm128
    %130 = vst.msk [vmem:[%s7] sm:$0x3] %vm129, %v124
    // Predicated region
    $region22: #{zero_shot_ris_forward.3} parent=1 // pred_check
      _
    $region23: #{zero_shot_ris_forward.3} parent=1 // pred_check_branch
      %132 = sbr.rel (0) target = $region25
    $region24: #{zero_shot_ris_forward.3} parent=1 // pred_region
      _
    $region25: #{zero_shot_ris_forward.3} parent=1 // pred_fallthru
      _
    // Predicated region
    $region26: #{zero_shot_ris_forward.3} parent=1 // pred_check
      _
    $region27: #{zero_shot_ris_forward.3} parent=1 // pred_check_branch
      %134 = sbr.rel (0) target = $region29
    $region28: #{zero_shot_ris_forward.3} parent=1 // pred_region
      %s136 = ssub.s32 16, 16
      %137 = vsyncadd [#allocation3], %s136
      %140 = dma.smem_to_hbm [#allocation2], 16, %s6, [#allocation3]
    $region29: #{zero_shot_ris_forward.3} parent=1 // pred_fallthru
      _
    // Predicated region
    $region30: #{zero_shot_ris_forward.3} parent=1 // pred_check
      _
    $region31: #{zero_shot_ris_forward.3} parent=1 // pred_check_branch
      %142 = sbr.rel (0) target = $region33
    $region32: #{zero_shot_ris_forward.3} parent=1 // pred_region
      _
    $region33: #{zero_shot_ris_forward.3} parent=1 // pred_fallthru
      _
    // Predicated region
    $region34: #{zero_shot_ris_forward.3} parent=1 // pred_check
      _
    $region35: #{zero_shot_ris_forward.3} parent=1 // pred_check_branch
      %144 = sbr.rel (0) target = $region37
    $region36: #{zero_shot_ris_forward.3} parent=1 // pred_region
      _
    $region37: #{zero_shot_ris_forward.3} parent=1 // pred_fallthru
      _
    // Predicated region
    $region38: #{zero_shot_ris_forward.3} parent=1 // pred_check
      _
    $region39: #{zero_shot_ris_forward.3} parent=1 // pred_check_branch
      %146 = sbr.rel (0) target = $region41
    $region40: #{zero_shot_ris_forward.3} parent=1 // pred_region
      %147 = dma.done [#allocation3], 16
    $region41: #{zero_shot_ris_forward.3} parent=1 // pred_fallthru
      _
    // Predicated region
    $region42: #{zero_shot_ris_forward.3} parent=1 // pred_check
      _
    $region43: #{zero_shot_ris_forward.3} parent=1 // pred_check_branch
      %149 = sbr.rel (0) target = $region45
    $region44: #{zero_shot_ris_forward.3} parent=1 // pred_region
      _
    $region45: #{zero_shot_ris_forward.3} parent=1 // pred_fallthru
      _
    %150 = sfence
    %151 = vsyncpa [#allocation3], 1

</llo_original>
